<compile_context>
chip_gen: v5e
topology: v5e:2x2
jax: 0.10.0
libtpu: 0.0.40
codegen_flags: <defaults>
</compile_context>

<pallas_src>
import functools

import jax
import jax.numpy as jnp
from jax.experimental import pallas as pl
from jax.experimental.pallas import tpu as pltpu

_LANE = 128
# (4096, 128) f32 block = 2 MiB per spike tensor; x2 tensors x2 pipeline buffers = 8 MiB VMEM.
# Large enough to amortize per-step overhead at v7x HBM rates, small enough for v7x's 64 MiB VMEM.
_DEFAULT_BLOCK_ROWS = 4096


def _cdiv(a, b):
    return -(-a // b)


def _round_up(x, m):
    return _cdiv(x, m) * m


def _combined_loss_kernel(e1_ref, e2_ref, lg1_ref, lg2_ref, lb1_ref, lb2_ref,
                          sp1_ref, sp2_ref, out_ref, *,
                          margin, alpha, total_rows, mask_tail):
    # ---- streamed spike partial sums: runs every grid step ----------------------
    blk = sp1_ref.shape[0]
    x1 = sp1_ref[...].astype(jnp.float32)
    x2 = sp2_ref[...].astype(jnp.float32)
    if mask_tail:
        # grid = cdiv(rows, block_rows): the last block reads past the end of the
        # un-padded spike slab (unspecified contents) -> zero those sublane rows.
        row = (pl.program_id(0) * blk
               + jax.lax.broadcasted_iota(jnp.int32, (blk, 1), 0))
        valid = row < total_rows
        x1 = jnp.where(valid, x1, 0.0)
        x2 = jnp.where(valid, x2, 0.0)
    # (blk,128) -> (1,128): VPU adds + one sublane (XLU) reduce per tile.  Direct row
    # stores; the wrapper only ever reads rows 0/1 (all tiles) and row 2 of tile 0.
    out_ref[0:1, :] = jnp.sum(x1, axis=0, keepdims=True)
    out_ref[1:2, :] = jnp.sum(x2, axis=0, keepdims=True)

    # ---- CE + contrastive: only on the first grid step --------------------------
    # Small inputs use constant index_maps -> VMEM-resident, never re-DMA'd.
    @pl.when(pl.program_id(0) == 0)
    def _():
        def ce(logits_ref, labels_ref):
            logits = logits_ref[...].astype(jnp.float32)              # [B, C]
            labels = labels_ref[...]                                   # [B, 1] int32
            b, c = logits.shape
            col = jax.lax.broadcasted_iota(jnp.int32, (b, c), 1)
            onehot = (col == labels).astype(jnp.float32)
            m = jnp.max(logits, axis=1, keepdims=True)
            lse = m + jnp.log(jnp.sum(jnp.exp(logits - m), axis=1, keepdims=True))
            correct = jnp.sum(onehot * logits, axis=1, keepdims=True)
            return jnp.mean(lse - correct)

        ce_loss = ce(lg1_ref, lb1_ref) + ce(lg2_ref, lb2_ref)

        e1 = e1_ref[...].astype(jnp.float32)
        e2 = e2_ref[...].astype(jnp.float32)
        diff = e1 - e2 + 1e-6                                          # F.pairwise_distance eps
        d2 = jnp.sum(diff * diff, axis=1, keepdims=True)               # [B, 1] == dist**2
        dist = jnp.sqrt(d2)                                            # only needed for hinge
        same = (lb1_ref[...] == lb2_ref[...]).astype(jnp.float32)      # [B, 1]
        hinge = jnp.maximum(margin - dist, 0.0)
        contrastive = same * d2 + (1.0 - same) * hinge * hinge
        scalar = alpha * ce_loss + (1.0 - alpha) * jnp.mean(contrastive)
        out_ref[2:3, :] = jnp.full((1, out_ref.shape[1]), scalar, jnp.float32)


def combined_loss(embeddings1, embeddings2, logits1, logits2,
                  labels1, labels2, spike1, spike2,
                  margin=2.0, alpha=0.65, beta=0.1, block_rows=_DEFAULT_BLOCK_ROWS):
    # labels arrive as [B]; keep them [B, 1] int32 so they live cleanly in VMEM.
    lb1 = labels1.astype(jnp.int32).reshape(-1, 1)
    lb2 = labels2.astype(jnp.int32).reshape(-1, 1)

    n1, n2 = int(spike1.size), int(spike2.size)
    assert n1 > 0 and n2 > 0, "empty spike tensors are not supported"

    # ---- spike tiling: flatten to lane-dense [rows, 128]; pad ONLY to a lane multiple ----
    rows = _cdiv(max(n1, n2), _LANE)
    padded_elems = rows * _LANE
    needs_pad = (padded_elems != n1) or (padded_elems != n2)

    def prep(sp):
        flat = sp.reshape(-1)                       # keep producer dtype (bf16/int8 welcome)
        pad = padded_elems - flat.shape[0]
        if pad:                                     # tiny zero pad; fused via allow_input_fusion
            flat = jnp.pad(flat, (0, pad))
        return flat.reshape(rows, _LANE)

    sp1, sp2 = prep(spike1), prep(spike2)

    # Big blocks amortize per-step overhead; cap so large inputs keep >= ~8 tiles so both
    # TensorCores on v7x get work.  block_rows is always a multiple of 8.
    block_rows = max(8, min(int(block_rows), _round_up(_cdiv(rows, 8), 8)))
    num_tiles = _cdiv(rows, block_rows)
    mask_tail = (rows % block_rows) != 0

    kernel = functools.partial(_combined_loss_kernel, margin=float(margin),
                               alpha=float(alpha), total_rows=rows, mask_tail=mask_tail)

    def small(shape):
        return pl.BlockSpec(shape, lambda i: (0, 0))   # VMEM-resident across the grid

    spike_spec = pl.BlockSpec((block_rows, _LANE), lambda i: (i, 0))

    compiler_kwargs = dict(
        dimension_semantics=("parallel",),             # shards the spike scan across TCs on v7x
        vmem_limit_bytes=48 * 1024 * 1024,             # < 64 MiB physical on v7x
    )
    if needs_pad:
        # Let XLA fuse the tiny lane pad / reshape into the pallas_call inputs instead of
        # materializing a padded HBM copy of each spike tensor.
        compiler_kwargs["allow_input_fusion"] = [False] * 6 + [True, True]

    parts = pl.pallas_call(
        kernel,
        out_shape=jax.ShapeDtypeStruct((num_tiles, 8, _LANE), jnp.float32),
        grid_spec=pltpu.PrefetchScalarGridSpec(
            num_scalar_prefetch=0,
            grid=(num_tiles,),
            in_specs=[
                small(embeddings1.shape), small(embeddings2.shape),
                small(logits1.shape), small(logits2.shape),
                small(lb1.shape), small(lb2.shape),
                spike_spec, spike_spec,
            ],
            out_specs=pl.BlockSpec((None, 8, _LANE), lambda i: (i, 0, 0)),
        ),
        compiler_params=pltpu.CompilerParams(**compiler_kwargs),
    )(embeddings1, embeddings2, logits1, logits2, lb1, lb2, sp1, sp2)

    # ---- tiny finalize in the wrapper (true element counts; beta applied here) ---------
    sp1_sum = jnp.sum(parts[:, 0, :])
    sp2_sum = jnp.sum(parts[:, 1, :])
    sparsity = 0.5 * (sp1_sum / n1 + sp2_sum / n2)
    scalar_terms = parts[0, 2, 0]                     # alpha*CE + (1-alpha)*contrastive
    return scalar_terms + beta * sparsity


def _reference(embeddings1, embeddings2, logits1, logits2, labels1, labels2,
               spike1, spike2, margin=2.0, alpha=0.65, beta=0.1):
    def ce(logits, labels):
        lse = jax.scipy.special.logsumexp(logits, axis=1)
        correct = jnp.take_along_axis(logits, labels[:, None], axis=1)[:, 0]
        return jnp.mean(lse - correct)

    ce_loss = ce(logits1, labels1) + ce(logits2, labels2)
    dist = jnp.linalg.norm(embeddings1 - embeddings2 + 1e-6, axis=1)
    same = (labels1 == labels2).astype(jnp.float32)
    contrastive = same * dist ** 2 + (1 - same) * jnp.maximum(margin - dist, 0.0) ** 2
    sparsity = (spike1.mean() + spike2.mean()) / 2
    return alpha * ce_loss + (1 - alpha) * contrastive.mean() + beta * sparsity


if __name__ == "__main__":
    key = jax.random.PRNGKey(0)
    ks = jax.random.split(key, 8)

    B, D, C, T, H = 8, 32, 10, 16, 32
    embeddings1 = jax.random.normal(ks[0], (B, D), dtype=jnp.float32)
    embeddings2 = jax.random.normal(ks[1], (B, D), dtype=jnp.float32)
    logits1 = jax.random.normal(ks[2], (B, C), dtype=jnp.float32)
    logits2 = jax.random.normal(ks[3], (B, C), dtype=jnp.float32)
    labels1 = jax.random.randint(ks[4], (B,), 0, C, dtype=jnp.int32)
    labels2 = jax.random.randint(ks[5], (B,), 0, C, dtype=jnp.int32)
    spike1 = (jax.random.uniform(ks[6], (B, T, H)) < 0.2).astype(jnp.float32)
    spike2 = (jax.random.uniform(ks[7], (B, T, H)) < 0.2).astype(jnp.float32)

    loss = combined_loss(embeddings1, embeddings2, logits1, logits2,
                         labels1, labels2, spike1, spike2)
    loss = jax.block_until_ready(loss)

    ref = _reference(embeddings1, embeddings2, logits1, logits2,
                     labels1, labels2, spike1, spike2)
    assert jnp.allclose(loss, ref, rtol=1e-5, atol=1e-5), (loss, ref)

    print("KERNEL_OK")
</pallas_src>

<mosaic_0001>
module attributes {stable_mosaic.version = 11 : i64} {
  func.func @_combined_loss_kernel(%arg0: i32, %arg1: memref<8x32xf32, #tpu.memory_space<vmem>>, %arg2: memref<8x32xf32, #tpu.memory_space<vmem>>, %arg3: memref<8x10xf32, #tpu.memory_space<vmem>>, %arg4: memref<8x10xf32, #tpu.memory_space<vmem>>, %arg5: memref<8x1xi32, #tpu.memory_space<vmem>>, %arg6: memref<8x1xi32, #tpu.memory_space<vmem>>, %arg7: memref<8x128xf32, #tpu.memory_space<vmem>>, %arg8: memref<8x128xf32, #tpu.memory_space<vmem>>, %arg9: memref<1x8x128xf32, #tpu.memory_space<vmem>>) attributes {dimension_semantics = [#tpu.dimension_semantics<parallel>], iteration_bounds = array<i64: 4>, scalar_prefetch = 0 : i64, scratch_operands = 0 : i64, tpu.core_type = #tpu.core_type<tc>, window_params = [{pipeline_mode = #tpu.pipeline_mode<synchronous>, transform_indices = @transform_0, window_bounds = array<i64: 8, 32>}, {pipeline_mode = #tpu.pipeline_mode<synchronous>, transform_indices = @transform_1, window_bounds = array<i64: 8, 32>}, {pipeline_mode = #tpu.pipeline_mode<synchronous>, transform_indices = @transform_2, window_bounds = array<i64: 8, 10>}, {pipeline_mode = #tpu.pipeline_mode<synchronous>, transform_indices = @transform_3, window_bounds = array<i64: 8, 10>}, {pipeline_mode = #tpu.pipeline_mode<synchronous>, transform_indices = @transform_4, window_bounds = array<i64: 8, 1>}, {pipeline_mode = #tpu.pipeline_mode<synchronous>, transform_indices = @transform_5, window_bounds = array<i64: 8, 1>}, {transform_indices = @transform_6, window_bounds = array<i64: 8, 128>}, {transform_indices = @transform_7, window_bounds = array<i64: 8, 128>}, {transform_indices = @transform_8, window_bounds = array<i64: 1, 8, 128>}]} {
    %c0 = arith.constant 0 : index
    %c0_0 = arith.constant 0 : index
    %0 = vector.load %arg7[%c0, %c0_0] : memref<8x128xf32, #tpu.memory_space<vmem>>, vector<8x128xf32>
    %c0_1 = arith.constant 0 : index
    %c0_2 = arith.constant 0 : index
    %1 = vector.load %arg8[%c0_1, %c0_2] : memref<8x128xf32, #tpu.memory_space<vmem>>, vector<8x128xf32>
    %cst = arith.constant dense<0.000000e+00> : vector<128xf32>
    %2 = vector.multi_reduction <add>, %0, %cst [0] : vector<8x128xf32> to vector<128xf32>
    %3 = vector.shape_cast %2 : vector<128xf32> to vector<1x128xf32>
    %c0_3 = arith.constant 0 : index
    %c0_4 = arith.constant 0 : index
    %c0_5 = arith.constant 0 : index
    %4 = vector.load %arg9[%c0_3, %c0_4, %c0_5] : memref<1x8x128xf32, #tpu.memory_space<vmem>>, vector<1x1x128xf32>
    %5 = vector.shape_cast %4 : vector<1x1x128xf32> to vector<1x128xf32>
    %6 = vector.shape_cast %3 : vector<1x128xf32> to vector<1x1x128xf32>
    tpu.vector_store %arg9[%c0_3, %c0_4, %c0_5], %6 {strides = array<i32>} : memref<1x8x128xf32, #tpu.memory_space<vmem>>, vector<1x1x128xf32>,
    %cst_6 = arith.constant dense<0.000000e+00> : vector<128xf32>
    %7 = vector.multi_reduction <add>, %1, %cst_6 [0] : vector<8x128xf32> to vector<128xf32>
    %8 = vector.shape_cast %7 : vector<128xf32> to vector<1x128xf32>
    %c0_7 = arith.constant 0 : index
    %c1 = arith.constant 1 : index
    %c0_8 = arith.constant 0 : index
    %9 = vector.load %arg9[%c0_7, %c1, %c0_8] : memref<1x8x128xf32, #tpu.memory_space<vmem>>, vector<1x1x128xf32>
    %10 = vector.shape_cast %9 : vector<1x1x128xf32> to vector<1x128xf32>
    %11 = vector.shape_cast %8 : vector<1x128xf32> to vector<1x1x128xf32>
    tpu.vector_store %arg9[%c0_7, %c1, %c0_8], %11 {strides = array<i32>} : memref<1x8x128xf32, #tpu.memory_space<vmem>>, vector<1x1x128xf32>,
    %c0_i32 = arith.constant 0 : i32
    %12 = arith.cmpi eq, %arg0, %c0_i32 : i32
    %13 = arith.extui %12 : i1 to i32
    %c0_i32_9 = arith.constant 0 : i32
    %14 = arith.cmpi ne, %13, %c0_i32_9 : i32
    scf.if %14 {
      %c0_10 = arith.constant 0 : index
      %c0_11 = arith.constant 0 : index
      %15 = vector.load %arg3[%c0_10, %c0_11] : memref<8x10xf32, #tpu.memory_space<vmem>>, vector<8x10xf32>
      %c0_12 = arith.constant 0 : index
      %c0_13 = arith.constant 0 : index
      %16 = vector.load %arg5[%c0_12, %c0_13] : memref<8x1xi32, #tpu.memory_space<vmem>>, vector<8x1xi32>
      %17 = tpu.iota {dimensions = array<i32: 1>} : vector<8x10xi32>
      %18 = vector.broadcast %16 : vector<8x1xi32> to vector<8x10xi32>
      %19 = arith.cmpi eq, %17, %18 : vector<8x10xi32>
      %20 = arith.extui %19 : vector<8x10xi1> to vector<8x10xi32>
      %21 = arith.sitofp %20 : vector<8x10xi32> to vector<8x10xf32>
      %cst_14 = arith.constant dense<0xFF800000> : vector<8xf32>
      %22 = vector.multi_reduction <maximumf>, %15, %cst_14 [1] : vector<8x10xf32> to vector<8xf32>
      %23 = vector.shape_cast %22 : vector<8xf32> to vector<8x1xf32>
      %24 = vector.broadcast %23 : vector<8x1xf32> to vector<8x10xf32>
      %25 = arith.subf %15, %24 : vector<8x10xf32>
      %26 = math.exp %25 : vector<8x10xf32>
      %cst_15 = arith.constant dense<0.000000e+00> : vector<8xf32>
      %27 = vector.multi_reduction <add>, %26, %cst_15 [1] : vector<8x10xf32> to vector<8xf32>
      %28 = vector.shape_cast %27 : vector<8xf32> to vector<8x1xf32>
      %29 = math.log %28 : vector<8x1xf32>
      %30 = arith.addf %23, %29 : vector<8x1xf32>
      %31 = arith.mulf %21, %15 : vector<8x10xf32>
      %cst_16 = arith.constant dense<0.000000e+00> : vector<8xf32>
      %32 = vector.multi_reduction <add>, %31, %cst_16 [1] : vector<8x10xf32> to vector<8xf32>
      %33 = vector.shape_cast %32 : vector<8xf32> to vector<8x1xf32>
      %34 = arith.subf %30, %33 : vector<8x1xf32>
      %35 = vector.shape_cast %34 : vector<8x1xf32> to vector<1x8x1xf32>
      %cst_17 = arith.constant dense<0.000000e+00> : vector<1xf32>
      %36 = vector.multi_reduction <add>, %35, %cst_17 [1, 2] : vector<1x8x1xf32> to vector<1xf32>
      %37 = vector.shape_cast %36 : vector<1xf32> to vector<1x1x1xf32>
      %38 = vector.extract %37[0, 0, 0] : f32 from vector<1x1x1xf32>
      %cst_18 = arith.constant 8.000000e+00 : f32
      %39 = arith.divf %38, %cst_18 : f32
      %c0_19 = arith.constant 0 : index
      %c0_20 = arith.constant 0 : index
      %40 = vector.load %arg4[%c0_19, %c0_20] : memref<8x10xf32, #tpu.memory_space<vmem>>, vector<8x10xf32>
      %c0_21 = arith.constant 0 : index
      %c0_22 = arith.constant 0 : index
      %41 = vector.load %arg6[%c0_21, %c0_22] : memref<8x1xi32, #tpu.memory_space<vmem>>, vector<8x1xi32>
      %42 = tpu.iota {dimensions = array<i32: 1>} : vector<8x10xi32>
      %43 = vector.broadcast %41 : vector<8x1xi32> to vector<8x10xi32>
      %44 = arith.cmpi eq, %42, %43 : vector<8x10xi32>
      %45 = arith.extui %44 : vector<8x10xi1> to vector<8x10xi32>
      %46 = arith.sitofp %45 : vector<8x10xi32> to vector<8x10xf32>
      %cst_23 = arith.constant dense<0xFF800000> : vector<8xf32>
      %47 = vector.multi_reduction <maximumf>, %40, %cst_23 [1] : vector<8x10xf32> to vector<8xf32>
      %48 = vector.shape_cast %47 : vector<8xf32> to vector<8x1xf32>
      %49 = vector.broadcast %48 : vector<8x1xf32> to vector<8x10xf32>
      %50 = arith.subf %40, %49 : vector<8x10xf32>
      %51 = math.exp %50 : vector<8x10xf32>
      %cst_24 = arith.constant dense<0.000000e+00> : vector<8xf32>
      %52 = vector.multi_reduction <add>, %51, %cst_24 [1] : vector<8x10xf32> to vector<8xf32>
      %53 = vector.shape_cast %52 : vector<8xf32> to vector<8x1xf32>
      %54 = math.log %53 : vector<8x1xf32>
      %55 = arith.addf %48, %54 : vector<8x1xf32>
      %56 = arith.mulf %46, %40 : vector<8x10xf32>
      %cst_25 = arith.constant dense<0.000000e+00> : vector<8xf32>
      %57 = vector.multi_reduction <add>, %56, %cst_25 [1] : vector<8x10xf32> to vector<8xf32>
      %58 = vector.shape_cast %57 : vector<8xf32> to vector<8x1xf32>
      %59 = arith.subf %55, %58 : vector<8x1xf32>
      %60 = vector.shape_cast %59 : vector<8x1xf32> to vector<1x8x1xf32>
      %cst_26 = arith.constant dense<0.000000e+00> : vector<1xf32>
      %61 = vector.multi_reduction <add>, %60, %cst_26 [1, 2] : vector<1x8x1xf32> to vector<1xf32>
      %62 = vector.shape_cast %61 : vector<1xf32> to vector<1x1x1xf32>
      %63 = vector.extract %62[0, 0, 0] : f32 from vector<1x1x1xf32>
      %cst_27 = arith.constant 8.000000e+00 : f32
      %64 = arith.divf %63, %cst_27 : f32
      %65 = arith.addf %39, %64 : f32
      %c0_28 = arith.constant 0 : index
      %c0_29 = arith.constant 0 : index
      %66 = vector.load %arg1[%c0_28, %c0_29] : memref<8x32xf32, #tpu.memory_space<vmem>>, vector<8x32xf32>
      %c0_30 = arith.constant 0 : index
      %c0_31 = arith.constant 0 : index
      %67 = vector.load %arg2[%c0_30, %c0_31] : memref<8x32xf32, #tpu.memory_space<vmem>>, vector<8x32xf32>
      %68 = arith.subf %66, %67 : vector<8x32xf32>
      %cst_32 = arith.constant 9.99999997E-7 : f32
      %69 = vector.broadcast %cst_32 : f32 to vector<8x32xf32>
      %70 = arith.addf %68, %69 : vector<8x32xf32>
      %71 = arith.mulf %70, %70 : vector<8x32xf32>
      %cst_33 = arith.constant dense<0.000000e+00> : vector<8xf32>
      %72 = vector.multi_reduction <add>, %71, %cst_33 [1] : vector<8x32xf32> to vector<8xf32>
      %73 = vector.shape_cast %72 : vector<8xf32> to vector<8x1xf32>
      %74 = math.sqrt %73 : vector<8x1xf32>
      %c0_34 = arith.constant 0 : index
      %c0_35 = arith.constant 0 : index
      %75 = vector.load %arg5[%c0_34, %c0_35] : memref<8x1xi32, #tpu.memory_space<vmem>>, vector<8x1xi32>
      %c0_36 = arith.constant 0 : index
      %c0_37 = arith.constant 0 : index
      %76 = vector.load %arg6[%c0_36, %c0_37] : memref<8x1xi32, #tpu.memory_space<vmem>>, vector<8x1xi32>
      %77 = arith.cmpi eq, %75, %76 : vector<8x1xi32>
      %78 = arith.extui %77 : vector<8x1xi1> to vector<8x1xi32>
      %79 = arith.sitofp %78 : vector<8x1xi32> to vector<8x1xf32>
      %cst_38 = arith.constant 2.000000e+00 : f32
      %80 = vector.broadcast %cst_38 : f32 to vector<8x1xf32>
      %81 = arith.subf %80, %74 : vector<8x1xf32>
      %cst_39 = arith.constant 0.000000e+00 : f32
      %82 = vector.broadcast %cst_39 : f32 to vector<8x1xf32>
      %83 = arith.maximumf %81, %82 : vector<8x1xf32>
      %84 = arith.mulf %79, %73 : vector<8x1xf32>
      %cst_40 = arith.constant 1.000000e+00 : f32
      %85 = vector.broadcast %cst_40 : f32 to vector<8x1xf32>
      %86 = arith.subf %85, %79 : vector<8x1xf32>
      %87 = arith.mulf %86, %83 : vector<8x1xf32>
      %88 = arith.mulf %87, %83 : vector<8x1xf32>
      %89 = arith.addf %84, %88 : vector<8x1xf32>
      %cst_41 = arith.constant 6.500000e-01 : f32
      %90 = arith.mulf %cst_41, %65 : f32
      %91 = vector.shape_cast %89 : vector<8x1xf32> to vector<1x8x1xf32>
      %cst_42 = arith.constant dense<0.000000e+00> : vector<1xf32>
      %92 = vector.multi_reduction <add>, %91, %cst_42 [1, 2] : vector<1x8x1xf32> to vector<1xf32>
      %93 = vector.shape_cast %92 : vector<1xf32> to vector<1x1x1xf32>
      %94 = vector.extract %93[0, 0, 0] : f32 from vector<1x1x1xf32>
      %cst_43 = arith.constant 8.000000e+00 : f32
      %95 = arith.divf %94, %cst_43 : f32
      %cst_44 = arith.constant 3.500000e-01 : f32
      %96 = arith.mulf %cst_44, %95 : f32
      %97 = arith.addf %90, %96 : f32
      %98 = vector.broadcast %97 : f32 to vector<1x128xf32>
      %c0_45 = arith.constant 0 : index
      %c2 = arith.constant 2 : index
      %c0_46 = arith.constant 0 : index
      %99 = vector.load %arg9[%c0_45, %c2, %c0_46] : memref<1x8x128xf32, #tpu.memory_space<vmem>>, vector<1x1x128xf32>
      %100 = vector.shape_cast %99 : vector<1x1x128xf32> to vector<1x128xf32>
      %101 = vector.shape_cast %98 : vector<1x128xf32> to vector<1x1x128xf32>
      tpu.vector_store %arg9[%c0_45, %c2, %c0_46], %101 {strides = array<i32>} : memref<1x8x128xf32, #tpu.memory_space<vmem>>, vector<1x1x128xf32>,
    } else {
    }
    return
  }
  func.func @transform_0(%arg0: i32) -> (i32, i32) {
    %c0_i32 = arith.constant 0 : i32
    %c0_i32_0 = arith.constant 0 : i32
    %c0_i32_1 = arith.constant 0 : i32
    return %c0_i32, %c0_i32_0 : i32, i32
  }
  func.func @transform_1(%arg0: i32) -> (i32, i32) {
    %c0_i32 = arith.constant 0 : i32
    %c0_i32_0 = arith.constant 0 : i32
    %c0_i32_1 = arith.constant 0 : i32
    return %c0_i32, %c0_i32_0 : i32, i32
  }
  func.func @transform_2(%arg0: i32) -> (i32, i32) {
    %c0_i32 = arith.constant 0 : i32
    %c0_i32_0 = arith.constant 0 : i32
    %c0_i32_1 = arith.constant 0 : i32
    return %c0_i32, %c0_i32_0 : i32, i32
  }
  func.func @transform_3(%arg0: i32) -> (i32, i32) {
    %c0_i32 = arith.constant 0 : i32
    %c0_i32_0 = arith.constant 0 : i32
    %c0_i32_1 = arith.constant 0 : i32
    return %c0_i32, %c0_i32_0 : i32, i32
  }
  func.func @transform_4(%arg0: i32) -> (i32, i32) {
    %c0_i32 = arith.constant 0 : i32
    %c0_i32_0 = arith.constant 0 : i32
    %c0_i32_1 = arith.constant 0 : i32
    return %c0_i32, %c0_i32_0 : i32, i32
  }
  func.func @transform_5(%arg0: i32) -> (i32, i32) {
    %c0_i32 = arith.constant 0 : i32
    %c0_i32_0 = arith.constant 0 : i32
    %c0_i32_1 = arith.constant 0 : i32
    return %c0_i32, %c0_i32_0 : i32, i32
  }
  func.func @transform_6(%arg0: i32) -> (i32, i32) {
    %c0_i32 = arith.constant 0 : i32
    %c0_i32_0 = arith.constant 0 : i32
    return %arg0, %c0_i32 : i32, i32
  }
  func.func @transform_7(%arg0: i32) -> (i32, i32) {
    %c0_i32 = arith.constant 0 : i32
    %c0_i32_0 = arith.constant 0 : i32
    return %arg0, %c0_i32 : i32, i32
  }
  func.func @transform_8(%arg0: i32) -> (i32, i32, i32) {
    %c0_i32 = arith.constant 0 : i32
    %c0_i32_0 = arith.constant 0 : i32
    %c0_i32_1 = arith.constant 0 : i32
    return %arg0, %c0_i32, %c0_i32_0 : i32, i32, i32
  }
}

</mosaic_0001>

<llo_original>
// kernel: tpu_custom_call.1
$region0: #{tpu_custom_call.1}
  #allocation0 [shape = 'u32[]', space=smem, size = 0x4, offset = 0x4, fixed_abs, tag = 'smem constant byte address 0x4 - core index']
  #allocation1 [shape = 'u32[72,128]{1,0:T(1,128)}', space=vmem, size = 0x9000, scoped, tag = 'internal scratch']
  %s0 = inlined_call_operand.vmem [shape: f32[8,32], index: 0, kind: input, shape index: {}]
  %s1 = inlined_call_operand.vmem [shape: f32[8,32], index: 1, kind: input, shape index: {}]
  %s2 = inlined_call_operand.hbm [shape: f32[8,10], index: 2, kind: input, shape index: {}]
  %s3 = inlined_call_operand.hbm [shape: f32[8,10], index: 3, kind: input, shape index: {}]
  %s4 = inlined_call_operand.vmem [shape: s32[8,1], index: 4, kind: input, shape index: {}]
  %s5 = inlined_call_operand.vmem [shape: s32[8,1], index: 5, kind: input, shape index: {}]
  %s6 = inlined_call_operand.hbm [shape: f32[32,128], index: 6, kind: input, shape index: {}]
  %s7 = inlined_call_operand.hbm [shape: f32[32,128], index: 7, kind: input, shape index: {}]
  %s8 = inlined_call_operand.hbm [shape: f32[4,8,128], index: 8, kind: output, shape index: {}]
  %s9 = sld [smem:[#allocation0]]
  $region85: #{tpu_custom_call.1} parent=0
    _
  %s11 = ssub.s32 1, %s9
  %s12 = scalar_select 0, %s11, %s9
  $region1: #{tpu_custom_call.1} parent=0
    #allocation2 [shape = 'u8[4096]{0}', space=vmem, size = 0x1000, scoped, tag = 'input window, operand 2, single buffered']
    #allocation3 [shape = 's32[2]{0}', space=sflag, size = 0x8, scoped, tag = 'scoped memory for tpu_custom_call.1']
    #allocation4 [shape = 's32[2]{0}', space=sflag, size = 0x8, scoped, tag = 'scoped memory for tpu_custom_call.1']
    #allocation5 [shape = 'u8[4096]{0}', space=vmem, size = 0x1000, scoped, tag = 'input window, operand 3, single buffered']
    #allocation6 [shape = 's32[1]{0}', space=sflag, size = 0x4, scoped, tag = 'scoped memory for tpu_custom_call.1']
    #allocation7 [shape = 'u8[8192]{0}', space=vmem, size = 0x2000, scoped, tag = 'input window, operand 6']
    #allocation8 [shape = 'u8[8192]{0}', space=vmem, size = 0x2000, scoped, tag = 'input window, operand 7']
    #allocation9 [shape = 'u8[8192]{0}', space=vmem, size = 0x2000, scoped, tag = 'output window, operand 0']
    %13 = vsyncpa [#allocation3], 0
    %14 = vsyncpa [#allocation6], 0
    %15 = vsyncpa [#allocation4], 0
    %s16 = scalar_lea.sflag [#allocation4], 1
    %17 = vsyncpa %s16, 0
    loop: start=0, step=1, limit=6
    $region2: #{tpu_custom_call.1} parent=1 // loop_pre_header
      _
    $region3: #{tpu_custom_call.1} parent=1 // loop_header
      %s19 = sphi 0, %s23
      %p20 = scmp.ge.s32.totalorder %s19, 6
      %s27 = sphi 0, %s27
      %s29 = sphi 0, %s27
      %s30 = sphi 0, %s29
      %s44 = sphi 0, %s30
      %s48 = sphi 0, %s48
      %s50 = sphi 0, %s48
      %s51 = sphi 0, %s50
      %s65 = sphi 0, %s51
      %s69 = sphi 0, %s69
      %s71 = sphi 0, %s69
      %s72 = sphi 0, %s71
      %s86 = sphi 0, %s72
      %s90 = sphi 0, %s90
      %s92 = sphi 0, %s90
      %s93 = sphi 0, %s92
      %s107 = sphi 0, %s93
      %s111 = sphi 0, %s111
      %s113 = sphi 0, %s111
      %s114 = sphi 0, %s113
      %s128 = sphi 0, %s114
      %s132 = sphi 0, %s132
      %s134 = sphi 0, %s132
      %s135 = sphi 0, %s134
      %s149 = sphi 0, %s135
      %s155 = sphi 0, %s157
      %s158 = sphi 0, %s155
      %s159 = sphi 0, %s158
      %s175 = sphi 0, %s159
      %s181 = sphi 0, %s183
      %s184 = sphi 0, %s181
      %s185 = sphi 0, %s184
      %s201 = sphi 0, %s185
      %s207 = sphi 0, %s209
      %s210 = sphi 0, %s207
      %s211 = sphi 0, %s210
      %s227 = sphi 0, %s211
    $region4: #{tpu_custom_call.1} parent=1 // loop_header_branch
      %22 = sbr.rel (%p20) target = $region8
    $region5: #{tpu_custom_call.1} parent=1 // loop_body
      %s24 = ssub.s32 %s19, 1
      %s25 = ssub.s32 %s19, 2
      %s26 = sadd.s32 %s19, 1
      %s28 = sadd.s32 %s27, 1
      %p31 = scmp.eq.s32.totalorder %s19, 3
      %p32 = scmp.ne.s32.totalorder %s27, %s29
      %p33 = scmp.eq.s32.totalorder %s19, 0
      %p34 = por %p32, %p33
      %p35 = scmp.ne.s32.totalorder %s27, %s29
      %p36 = scmp.eq.s32.totalorder %s24, 3
      %p37 = por %p35, %p36
      %p38 = scmp.ne.s32.totalorder %s29, %s30
      %p39 = scmp.eq.s32.totalorder %s24, 0
      %p40 = por %p38, %p39
      %p41 = scmp.ne.s32.totalorder %s29, %s30
      %p42 = scmp.eq.s32.totalorder %s25, 3
      %p43 = por %p41, %p42
      %p45 = scmp.ne.s32.totalorder %s30, %s44
      %p46 = scmp.eq.s32.totalorder %s25, 0
      %p47 = por %p45, %p46
      %s49 = sadd.s32 %s48, 1
      %p52 = scmp.eq.s32.totalorder %s19, 3
      %p53 = scmp.ne.s32.totalorder %s48, %s50
      %p54 = scmp.eq.s32.totalorder %s19, 0
      %p55 = por %p53, %p54
      %p56 = scmp.ne.s32.totalorder %s48, %s50
      %p57 = scmp.eq.s32.totalorder %s24, 3
      %p58 = por %p56, %p57
      %p59 = scmp.ne.s32.totalorder %s50, %s51
      %p60 = scmp.eq.s32.totalorder %s24, 0
      %p61 = por %p59, %p60
      %p62 = scmp.ne.s32.totalorder %s50, %s51
      %p63 = scmp.eq.s32.totalorder %s25, 3
      %p64 = por %p62, %p63
      %p66 = scmp.ne.s32.totalorder %s51, %s65
      %p67 = scmp.eq.s32.totalorder %s25, 0
      %p68 = por %p66, %p67
      %s70 = sadd.s32 %s69, 1
      %p73 = scmp.eq.s32.totalorder %s19, 3
      %p74 = scmp.ne.s32.totalorder %s69, %s71
      %p75 = scmp.eq.s32.totalorder %s19, 0
      %p76 = por %p74, %p75
      %p77 = scmp.ne.s32.totalorder %s69, %s71
      %p78 = scmp.eq.s32.totalorder %s24, 3
      %p79 = por %p77, %p78
      %p80 = scmp.ne.s32.totalorder %s71, %s72
      %p81 = scmp.eq.s32.totalorder %s24, 0
      %p82 = por %p80, %p81
      %p83 = scmp.ne.s32.totalorder %s71, %s72
      %p84 = scmp.eq.s32.totalorder %s25, 3
      %p85 = por %p83, %p84
      %p87 = scmp.ne.s32.totalorder %s72, %s86
      %p88 = scmp.eq.s32.totalorder %s25, 0
      %p89 = por %p87, %p88
      %s91 = sadd.s32 %s90, 1
      %p94 = scmp.eq.s32.totalorder %s19, 3
      %p95 = scmp.ne.s32.totalorder %s90, %s92
      %p96 = scmp.eq.s32.totalorder %s19, 0
      %p97 = por %p95, %p96
      %p98 = scmp.ne.s32.totalorder %s90, %s92
      %p99 = scmp.eq.s32.totalorder %s24, 3
      %p100 = por %p98, %p99
      %p101 = scmp.ne.s32.totalorder %s92, %s93
      %p102 = scmp.eq.s32.totalorder %s24, 0
      %p103 = por %p101, %p102
      %p104 = scmp.ne.s32.totalorder %s92, %s93
      %p105 = scmp.eq.s32.totalorder %s25, 3
      %p106 = por %p104, %p105
      %p108 = scmp.ne.s32.totalorder %s93, %s107
      %p109 = scmp.eq.s32.totalorder %s25, 0
      %p110 = por %p108, %p109
      %s112 = sadd.s32 %s111, 1
      %p115 = scmp.eq.s32.totalorder %s19, 3
      %p116 = scmp.ne.s32.totalorder %s111, %s113
      %p117 = scmp.eq.s32.totalorder %s19, 0
      %p118 = por %p116, %p117
      %p119 = scmp.ne.s32.totalorder %s111, %s113
      %p120 = scmp.eq.s32.totalorder %s24, 3
      %p121 = por %p119, %p120
      %p122 = scmp.ne.s32.totalorder %s113, %s114
      %p123 = scmp.eq.s32.totalorder %s24, 0
      %p124 = por %p122, %p123
      %p125 = scmp.ne.s32.totalorder %s113, %s114
      %p126 = scmp.eq.s32.totalorder %s25, 3
      %p127 = por %p125, %p126
      %p129 = scmp.ne.s32.totalorder %s114, %s128
      %p130 = scmp.eq.s32.totalorder %s25, 0
      %p131 = por %p129, %p130
      %s133 = sadd.s32 %s132, 1
      %p136 = scmp.eq.s32.totalorder %s19, 3
      %p137 = scmp.ne.s32.totalorder %s132, %s134
      %p138 = scmp.eq.s32.totalorder %s19, 0
      %p139 = por %p137, %p138
      %p140 = scmp.ne.s32.totalorder %s132, %s134
      %p141 = scmp.eq.s32.totalorder %s24, 3
      %p142 = por %p140, %p141
      %p143 = scmp.ne.s32.totalorder %s134, %s135
      %p144 = scmp.eq.s32.totalorder %s24, 0
      %p145 = por %p143, %p144
      %p146 = scmp.ne.s32.totalorder %s134, %s135
      %p147 = scmp.eq.s32.totalorder %s25, 3
      %p148 = por %p146, %p147
      %p150 = scmp.ne.s32.totalorder %s135, %s149
      %p151 = scmp.eq.s32.totalorder %s25, 0
      %p152 = por %p150, %p151
      %s153 = ssub.s32 %s19, %s26
      %p154 = scmp.eq.s32.totalorder %s153, 0
      %s156 = sadd.s32 %s155, 1
      %s157 = scalar_select %p154, %s155, %s156
      %p160 = pneg %p154
      %p161 = scmp.eq.s32.totalorder %s19, 3
      %p162 = por %p160, %p161
      %p163 = scmp.ne.s32.totalorder %s155, %s158
      %p164 = scmp.eq.s32.totalorder %s19, 0
      %p165 = por %p163, %p164
      %p166 = scmp.ne.s32.totalorder %s155, %s158
      %p167 = scmp.eq.s32.totalorder %s24, 3
      %p168 = por %p166, %p167
      %p169 = scmp.ne.s32.totalorder %s158, %s159
      %p170 = scmp.eq.s32.totalorder %s24, 0
      %p171 = por %p169, %p170
      %p172 = scmp.ne.s32.totalorder %s158, %s159
      %p173 = scmp.eq.s32.totalorder %s25, 3
      %p174 = por %p172, %p173
      %p176 = scmp.ne.s32.totalorder %s159, %s175
      %p177 = scmp.eq.s32.totalorder %s25, 0
      %p178 = por %p176, %p177
      %s179 = ssub.s32 %s19, %s26
      %p180 = scmp.eq.s32.totalorder %s179, 0
      %s182 = sadd.s32 %s181, 1
      %s183 = scalar_select %p180, %s181, %s182
      %p186 = pneg %p180
      %p187 = scmp.eq.s32.totalorder %s19, 3
      %p188 = por %p186, %p187
      %p189 = scmp.ne.s32.totalorder %s181, %s184
      %p190 = scmp.eq.s32.totalorder %s19, 0
      %p191 = por %p189, %p190
      %p192 = scmp.ne.s32.totalorder %s181, %s184
      %p193 = scmp.eq.s32.totalorder %s24, 3
      %p194 = por %p192, %p193
      %p195 = scmp.ne.s32.totalorder %s184, %s185
      %p196 = scmp.eq.s32.totalorder %s24, 0
      %p197 = por %p195, %p196
      %p198 = scmp.ne.s32.totalorder %s184, %s185
      %p199 = scmp.eq.s32.totalorder %s25, 3
      %p200 = por %p198, %p199
      %p202 = scmp.ne.s32.totalorder %s185, %s201
      %p203 = scmp.eq.s32.totalorder %s25, 0
      %p204 = por %p202, %p203
      %s205 = ssub.s32 %s19, %s26
      %p206 = scmp.eq.s32.totalorder %s205, 0
      %s208 = sadd.s32 %s207, 1
      %s209 = scalar_select %p206, %s207, %s208
      %p212 = pneg %p206
      %p213 = scmp.eq.s32.totalorder %s19, 3
      %p214 = por %p212, %p213
      %p215 = scmp.ne.s32.totalorder %s207, %s210
      %p216 = scmp.eq.s32.totalorder %s19, 0
      %p217 = por %p215, %p216
      %p218 = scmp.ne.s32.totalorder %s207, %s210
      %p219 = scmp.eq.s32.totalorder %s24, 3
      %p220 = por %p218, %p219
      %p221 = scmp.ne.s32.totalorder %s210, %s211
      %p222 = scmp.eq.s32.totalorder %s24, 0
      %p223 = por %p221, %p222
      %p224 = scmp.ne.s32.totalorder %s210, %s211
      %p225 = scmp.eq.s32.totalorder %s25, 3
      %p226 = por %p224, %p225
      %p228 = scmp.ne.s32.totalorder %s211, %s227
      %p229 = scmp.eq.s32.totalorder %s25, 0
      %p230 = por %p228, %p229
      %p231 = scmp.le.s32.totalorder 1, %s19
      %p232 = scmp.lt.s32.totalorder %s19, 5
      %p233 = pnand %p231, %p232
      %p234 = pneg %p233
      // Predicated region
      $region9: #{tpu_custom_call.1} parent=5 // pred_check
        _
      $region10: #{tpu_custom_call.1} parent=5 // pred_check_branch
        %236 = sbr.rel (%p233) target = $region12
      $region11: #{tpu_custom_call.1} parent=5 // pred_region
        %s237 = ssub.s32 %s19, 1
        // Predicated region
        $region13: #{tpu_custom_call.1} parent=11 // pred_check
          %p238 = pneg %p40
        $region14: #{tpu_custom_call.1} parent=11 // pred_check_branch
          %240 = sbr.rel (%p238) target = $region16
        $region15: #{tpu_custom_call.1} parent=11 // pred_region
          _
        $region16: #{tpu_custom_call.1} parent=11 // pred_fallthru
          _
        // Predicated region
        $region17: #{tpu_custom_call.1} parent=11 // pred_check
          %p241 = pneg %p61
        $region18: #{tpu_custom_call.1} parent=11 // pred_check_branch
          %243 = sbr.rel (%p241) target = $region20
        $region19: #{tpu_custom_call.1} parent=11 // pred_region
          _
        $region20: #{tpu_custom_call.1} parent=11 // pred_fallthru
          _
        // Predicated region
        $region21: #{tpu_custom_call.1} parent=11 // pred_check
          %p244 = pneg %p82
        $region22: #{tpu_custom_call.1} parent=11 // pred_check_branch
          %246 = sbr.rel (%p244) target = $region24
        $region23: #{tpu_custom_call.1} parent=11 // pred_region
          %248 = vsyncadd [#allocation3], 0
          %s250 = sshll.u32 %s2, 4
          %s251 = int_to_ptr.hbm [resolvable:$true] %s250
          %s252 = sshll.u32 [#allocation2], 4
          %s253 = int_to_ptr.vmem [resolvable:$true] %s252
          %255 = dma.hbm_to_vmem [thread:$0]  %s251, 128, %s253, [#allocation3]
        $region24: #{tpu_custom_call.1} parent=11 // pred_fallthru
          _
        // Predicated region
        $region25: #{tpu_custom_call.1} parent=11 // pred_check
          %p256 = pneg %p103
        $region26: #{tpu_custom_call.1} parent=11 // pred_check_branch
          %258 = sbr.rel (%p256) target = $region28
        $region27: #{tpu_custom_call.1} parent=11 // pred_region
          %260 = vsyncadd [#allocation6], 0
          %s262 = sshll.u32 %s3, 4
          %s263 = int_to_ptr.hbm [resolvable:$true] %s262
          %s264 = sshll.u32 [#allocation5], 4
          %s265 = int_to_ptr.vmem [resolvable:$true] %s264
          %267 = dma.hbm_to_vmem [thread:$0]  %s263, 128, %s265, [#allocation6]
        $region28: #{tpu_custom_call.1} parent=11 // pred_fallthru
          _
        // Predicated region
        $region29: #{tpu_custom_call.1} parent=11 // pred_check
          %p268 = pneg %p124
        $region30: #{tpu_custom_call.1} parent=11 // pred_check_branch
          %270 = sbr.rel (%p268) target = $region32
        $region31: #{tpu_custom_call.1} parent=11 // pred_region
          _
        $region32: #{tpu_custom_call.1} parent=11 // pred_fallthru
          _
        // Predicated region
        $region33: #{tpu_custom_call.1} parent=11 // pred_check
          %p271 = pneg %p145
        $region34: #{tpu_custom_call.1} parent=11 // pred_check_branch
          %273 = sbr.rel (%p271) target = $region36
        $region35: #{tpu_custom_call.1} parent=11 // pred_region
          _
        $region36: #{tpu_custom_call.1} parent=11 // pred_fallthru
          _
      $region12: #{tpu_custom_call.1} parent=5 // pred_fallthru
        _
      %p274 = scmp.lt.s32.totalorder %s19, 4
      // Predicated region
      $region37: #{tpu_custom_call.1} parent=5 // pred_check
        %p275 = pneg %p274
      $region38: #{tpu_custom_call.1} parent=5 // pred_check_branch
        %277 = sbr.rel (%p275) target = $region40
      $region39: #{tpu_custom_call.1} parent=5 // pred_region
        // Predicated region
        $region41: #{tpu_custom_call.1} parent=39 // pred_check
          %p278 = pneg %p165
        $region42: #{tpu_custom_call.1} parent=39 // pred_check_branch
          %280 = sbr.rel (%p278) target = $region44
        $region43: #{tpu_custom_call.1} parent=39 // pred_region
          %s281 = sand.u32 %s19, 1
          %s282 = scalar_lea.sflag [#allocation3], %s281
          %s283 = sand.u32 %s155, 1
          %s284 = smul.addr %s283, 8
          %s285 = scalar_lea.vmem [#allocation7], %s284
          %287 = vsyncadd %s282, 0
          %s288 = smul.addr %s19, 8
          %s289 = scalar_lea.hbm %s6, %s288
          %s291 = sshll.u32 %s289, 4
          %s292 = int_to_ptr.hbm [resolvable:$true] %s291
          %s293 = sshll.u32 %s285, 4
          %s294 = int_to_ptr.vmem [resolvable:$true] %s293
          %296 = dma.hbm_to_vmem [thread:$0]  %s292, 128, %s294, %s282
        $region44: #{tpu_custom_call.1} parent=39 // pred_fallthru
          _
        // Predicated region
        $region45: #{tpu_custom_call.1} parent=39 // pred_check
          %p297 = pneg %p191
        $region46: #{tpu_custom_call.1} parent=39 // pred_check_branch
          %299 = sbr.rel (%p297) target = $region48
        $region47: #{tpu_custom_call.1} parent=39 // pred_region
          %s300 = sand.u32 %s19, 1
          %s301 = scalar_lea.sflag [#allocation3], %s300
          %s302 = sand.u32 %s181, 1
          %s303 = smul.addr %s302, 8
          %s304 = scalar_lea.vmem [#allocation8], %s303
          %306 = vsyncadd %s301, 0
          %s307 = smul.addr %s19, 8
          %s308 = scalar_lea.hbm %s7, %s307
          %s310 = sshll.u32 %s308, 4
          %s311 = int_to_ptr.hbm [resolvable:$true] %s310
          %s312 = sshll.u32 %s304, 4
          %s313 = int_to_ptr.vmem [resolvable:$true] %s312
          %315 = dma.hbm_to_vmem [thread:$0]  %s311, 128, %s313, %s301
        $region48: #{tpu_custom_call.1} parent=39 // pred_fallthru
          _
      $region40: #{tpu_custom_call.1} parent=5 // pred_fallthru
        _
      %p316 = scmp.le.s32.totalorder 1, %s19
      %p317 = scmp.lt.s32.totalorder %s19, 5
      %p318 = pnand %p316, %p317
      %p319 = pneg %p318
      // Predicated region
      $region49: #{tpu_custom_call.1} parent=5 // pred_check
        _
      $region50: #{tpu_custom_call.1} parent=5 // pred_check_branch
        %321 = sbr.rel (%p318) target = $region52
      $region51: #{tpu_custom_call.1} parent=5 // pred_region
        %s322 = ssub.s32 %s19, 1
        // Predicated region
        $region53: #{tpu_custom_call.1} parent=51 // pred_check
          %p323 = pneg %p82
        $region54: #{tpu_custom_call.1} parent=51 // pred_check_branch
          %325 = sbr.rel (%p323) target = $region56
        $region55: #{tpu_custom_call.1} parent=51 // pred_region
          %327 = dma.done [#allocation3], 128
        $region56: #{tpu_custom_call.1} parent=51 // pred_fallthru
          _
        // Predicated region
        $region57: #{tpu_custom_call.1} parent=51 // pred_check
          %p328 = pneg %p103
        $region58: #{tpu_custom_call.1} parent=51 // pred_check_branch
          %330 = sbr.rel (%p328) target = $region60
        $region59: #{tpu_custom_call.1} parent=51 // pred_region
          %332 = dma.done [#allocation6], 128
        $region60: #{tpu_custom_call.1} parent=51 // pred_fallthru
          _
        %s333 = sand.u32 %s24, 1
        %s334 = scalar_lea.sflag [#allocation3], %s333
        %s335 = sand.u32 %s158, 1
        %s336 = smul.addr %s335, 8
        %s337 = scalar_lea.vmem [#allocation7], %s336
        // Predicated region
        $region61: #{tpu_custom_call.1} parent=51 // pred_check
          %p338 = pneg %p171
        $region62: #{tpu_custom_call.1} parent=51 // pred_check_branch
          %340 = sbr.rel (%p338) target = $region64
        $region63: #{tpu_custom_call.1} parent=51 // pred_region
          %342 = dma.done %s334, 128
        $region64: #{tpu_custom_call.1} parent=51 // pred_fallthru
          _
        %s343 = sand.u32 %s24, 1
        %s344 = scalar_lea.sflag [#allocation3], %s343
        %s345 = sand.u32 %s184, 1
        %s346 = smul.addr %s345, 8
        %s347 = scalar_lea.vmem [#allocation8], %s346
        // Predicated region
        $region65: #{tpu_custom_call.1} parent=51 // pred_check
          %p348 = pneg %p197
        $region66: #{tpu_custom_call.1} parent=51 // pred_check_branch
          %350 = sbr.rel (%p348) target = $region68
        $region67: #{tpu_custom_call.1} parent=51 // pred_region
          %352 = dma.done %s344, 128
        $region68: #{tpu_custom_call.1} parent=51 // pred_fallthru
          _
        %p353 = pneg %p40
        %p354 = pneg %p37
        %p355 = pneg %p61
        %p356 = pneg %p58
        %p357 = pneg %p82
        %p358 = pneg %p79
        %p359 = pneg %p103
        %p360 = pneg %p100
        %p361 = pneg %p124
        %p362 = pneg %p121
        %p363 = pneg %p145
        %p364 = pneg %p142
        %s365 = sand.u32 %s24, 1
        %s366 = scalar_lea.sflag [#allocation3], %s365
        %s367 = sand.u32 %s158, 1
        %s368 = smul.addr %s367, 8
        %s369 = scalar_lea.vmem [#allocation7], %s368
        %p370 = pneg %p171
        %p371 = pneg %p168
        %s372 = sand.u32 %s24, 1
        %s373 = scalar_lea.sflag [#allocation3], %s372
        %s374 = sand.u32 %s184, 1
        %s375 = smul.addr %s374, 8
        %s376 = scalar_lea.vmem [#allocation8], %s375
        %p377 = pneg %p197
        %p378 = pneg %p194
        %p379 = pneg %p223
        %p380 = pneg %p220
        %s381 = sand.u32 %s210, 1
        %s382 = scalar_lea.sflag [#allocation4], %s381
        %s383 = sand.u32 %s210, 1
        %s384 = smul.addr %s383, 8
        %s385 = scalar_lea.vmem [#allocation9], %s384
        %v386 = vld [vmem:[%s337] sm:$0xff]
        %v387 = vld [vmem:[%s347] sm:$0xff]
        %v388 = vrot.slane %v386, 4
        %v389 = vadd.f32 %v386, %v388
        %v390 = vrot.slane %v389, 2
        %v391 = vadd.f32 %v389, %v390
        %v392 = vrot.slane %v391, 1
        %v393 = vadd.f32 %v391, %v392
        %394 = vst [vmem:[%s385] sm:$0x1] %v393
        %v395 = vrot.slane %v387, 4
        %v396 = vadd.f32 %v387, %v395
        %v397 = vrot.slane %v396, 2
        %v398 = vadd.f32 %v396, %v397
        %v399 = vrot.slane %v398, 1
        %v400 = vadd.f32 %v398, %v399
        %401 = vst [vmem:[%s385 + $0x1] sm:$0x1] %v400
        %p402 = scmp.eq.s32.totalorder %s24, 0
        // Predicated region
        $region69: #{tpu_custom_call.1} parent=51 // pred_check
          %p403 = pneg %p402
        $region70: #{tpu_custom_call.1} parent=51 // pred_check_branch
          %405 = sbr.rel (%p403) target = $region72
        $region71: #{tpu_custom_call.1} parent=51 // pred_region
          %v406 = vld [vmem:[#allocation2] sm:$0xff]
          %v407 = vld [vmem:[%s4] sm:$0xff]
          %v408 = vlaneseq
          %v409 = vand.u32 %v408, 127
          %410 = vset.pattern.permute.xlu0 0
          %411 = vperm.xlu0 %410, %v407
          %v412 = vpop.permute.xlu0 %411
          %vm413 = vcmp.eq.s32.totalorder %v409, %v412
          %v414 = vsel %vm413, 1, 0
          %v415 = vcvt.s32.f32 %v414
          %vm416 = vcmask 80896
          %v417 = vsel %vm416, %v406, -inf
          %418 = vmax.xlane.f32.xlu0 %v417
          %v419 = vpop.xlane.xlu0 %418
          %v420 = vsub.f32 %v406, %v419
          %v421 = vmul.f32 %v420, 1.442695
          %v422 = vpow.pop %v421
          %v423 = vsel %vm416, %v422, 0.0
          %424 = vadd.xlane.f32.xlu0 %v423
          %v425 = vpop.xlane.xlu0 %424
          %v426 = vlog2.pop %v425
          %v427 = vmul.f32 %v426, 0.6931472
          %v428 = vadd.f32 %v419, %v427
          %v429 = vmul.f32 %v415, %v406
          %v430 = vsel %vm416, %v429, 0.0
          %431 = vadd.xlane.f32.xlu0 %v430
          %v432 = vpop.xlane.xlu0 %431
          %v433 = vsub.f32 %v428, %v432
          %vm434 = vcmask 7168
          %v435 = vsel %vm434, %v433, 0.0
          %436 = vadd.xlane.f32.xlu0 %v435
          %v437 = vpop.xlane.xlu0 %436
          %v438 = vrot.slane %v437, 4
          %v439 = vadd.f32 %v437, %v438
          %v440 = vrot.slane %v439, 2
          %v441 = vadd.f32 %v439, %v440
          %v442 = vrot.slane %v441, 1
          %v443 = vadd.f32 %v441, %v442
          %s444 = vtos %v443
          %v445 = vrcp.pop 8.0
          %v446 = vmul.f32 8.0, %v445
          %v447 = vsub.f32 1.0, %v446
          %v448 = vmul.f32 %v445, %v447
          %v449 = vadd.f32 %v445, %v448
          %vm450 = vweird.f32 %v445
          %v451 = vsel %vm450, %v445, %v449
          %s452 = vtos %v451
          %s453 = smul.f32 %s444, %s452
          %v454 = vld [vmem:[#allocation5] sm:$0xff]
          %v455 = vld [vmem:[%s5] sm:$0xff]
          %456 = vset.pattern.permute.xlu0 0
          %457 = vperm.xlu0 %456, %v455
          %v458 = vpop.permute.xlu0 %457
          %vm459 = vcmp.eq.s32.totalorder %v409, %v458
          %v460 = vsel %vm459, 1, 0
          %v461 = vcvt.s32.f32 %v460
          %v462 = vsel %vm416, %v454, -inf
          %463 = vmax.xlane.f32.xlu0 %v462
          %v464 = vpop.xlane.xlu0 %463
          %v465 = vsub.f32 %v454, %v464
          %v466 = vmul.f32 %v465, 1.442695
          %v467 = vpow.pop %v466
          %v468 = vsel %vm416, %v467, 0.0
          %469 = vadd.xlane.f32.xlu0 %v468
          %v470 = vpop.xlane.xlu0 %469
          %v471 = vlog2.pop %v470
          %v472 = vmul.f32 %v471, 0.6931472
          %v473 = vadd.f32 %v464, %v472
          %v474 = vmul.f32 %v461, %v454
          %v475 = vsel %vm416, %v474, 0.0
          %476 = vadd.xlane.f32.xlu0 %v475
          %v477 = vpop.xlane.xlu0 %476
          %v478 = vsub.f32 %v473, %v477
          %v479 = vsel %vm434, %v478, 0.0
          %480 = vadd.xlane.f32.xlu0 %v479
          %v481 = vpop.xlane.xlu0 %480
          %v482 = vrot.slane %v481, 4
          %v483 = vadd.f32 %v481, %v482
          %v484 = vrot.slane %v483, 2
          %v485 = vadd.f32 %v483, %v484
          %v486 = vrot.slane %v485, 1
          %v487 = vadd.f32 %v485, %v486
          %s488 = vtos %v487
          %v489 = vrcp.pop 8.0
          %v490 = vmul.f32 8.0, %v489
          %v491 = vsub.f32 1.0, %v490
          %v492 = vmul.f32 %v489, %v491
          %v493 = vadd.f32 %v489, %v492
          %vm494 = vweird.f32 %v489
          %v495 = vsel %vm494, %v489, %v493
          %s496 = vtos %v495
          %s497 = smul.f32 %s488, %s496
          %s498 = sadd.f32 %s453, %s497
          %v499 = vld [vmem:[%s0] sm:$0xff]
          %v500 = vld [vmem:[%s1] sm:$0xff]
          %v501 = vsub.f32 %v499, %v500
          %v502 = vadd.f32 %v501, 1e-06
          %v503 = vmul.f32 %v502, %v502
          %vm504 = vcmask 261120
          %v505 = vsel %vm504, %v503, 0.0
          %506 = vadd.xlane.f32.xlu0 %v505
          %v507 = vpop.xlane.xlu0 %506
          %v508 = vrsqrt.pop %v507
          %v509 = vmul.f32 %v508, %v507
          %v510 = vmul.f32 %v509, %v508
          %v511 = vmul.f32 0.5, %v510
          %v512 = vsub.f32 1.5, %v511
          %v513 = vmul.f32 %v508, %v512
          %v514 = vmul.f32 %v507, %v513
          %vm515 = vcmp.eq.f32.partialorder %v507, inf
          %v516 = vsel %vm515, %v507, %v514
          %vm517 = vcmp.eq.f32.partialorder %v507, 0.0
          %v518 = vand.u32 %v507, 2147483648
          %v519 = vsel %vm517, %v518, %v516
          %vm520 = vcmp.eq.s32.totalorder %v407, %v455
          %v521 = vsel %vm520, 1, 0
          %v522 = vcvt.s32.f32 %v521
          %v523 = vsub.f32 2.0, %v519
          %v524 = vmax.f32 %v523, 0.0
          %v525 = vmul.f32 %v522, %v507
          %v526 = vsub.f32 1.0, %v522
          %v527 = vmul.f32 %v526, %v524
          %v528 = vmul.f32 %v527, %v524
          %v529 = vadd.f32 %v525, %v528
          %s530 = smul.f32 %s498, 0.65
          %v531 = vsel %vm434, %v529, 0.0
          %532 = vadd.xlane.f32.xlu0 %v531
          %v533 = vpop.xlane.xlu0 %532
          %v534 = vrot.slane %v533, 4
          %v535 = vadd.f32 %v533, %v534
          %v536 = vrot.slane %v535, 2
          %v537 = vadd.f32 %v535, %v536
          %v538 = vrot.slane %v537, 1
          %v539 = vadd.f32 %v537, %v538
          %s540 = vtos %v539
          %v541 = vrcp.pop 8.0
          %v542 = vmul.f32 8.0, %v541
          %v543 = vsub.f32 1.0, %v542
          %v544 = vmul.f32 %v541, %v543
          %v545 = vadd.f32 %v541, %v544
          %vm546 = vweird.f32 %v541
          %v547 = vsel %vm546, %v541, %v545
          %s548 = vtos %v547
          %s549 = smul.f32 %s540, %s548
          %s550 = smul.f32 %s549, 0.35
          %s551 = sadd.f32 %s530, %s550
          %v552 = vstv %s551
          %553 = vst [vmem:[%s385 + $0x2] sm:$0x1] %v552
        $region72: #{tpu_custom_call.1} parent=51 // pred_fallthru
          _
        %s554 = sand.u32 %s210, 1
        %s555 = scalar_lea.sflag [#allocation4], %s554
        %s556 = sand.u32 %s210, 1
        %s557 = smul.addr %s556, 8
        %s558 = scalar_lea.vmem [#allocation9], %s557
        // Predicated region
        $region73: #{tpu_custom_call.1} parent=51 // pred_check
          %p559 = pneg %p220
        $region74: #{tpu_custom_call.1} parent=51 // pred_check_branch
          %561 = sbr.rel (%p559) target = $region76
        $region75: #{tpu_custom_call.1} parent=51 // pred_region
          %563 = vsyncadd %s555, 0
          %s564 = smul.addr %s24, 8
          %s565 = scalar_lea.hbm %s8, %s564
          %s567 = sshll.u32 %s558, 4
          %s568 = int_to_ptr.vmem [resolvable:$true] %s567
          %s569 = sshll.u32 %s565, 4
          %s570 = int_to_ptr.hbm [resolvable:$true] %s569
          %572 = dma.vmem_to_hbm [thread:$0]  %s568, 128, %s570, %s555
        $region76: #{tpu_custom_call.1} parent=51 // pred_fallthru
          _
      $region52: #{tpu_custom_call.1} parent=5 // pred_fallthru
        _
      %p573 = scmp.le.s32.totalorder 2, %s19
      // Predicated region
      $region77: #{tpu_custom_call.1} parent=5 // pred_check
        %p574 = pneg %p573
      $region78: #{tpu_custom_call.1} parent=5 // pred_check_branch
        %576 = sbr.rel (%p574) target = $region80
      $region79: #{tpu_custom_call.1} parent=5 // pred_region
        %s577 = ssub.s32 %s19, 2
        // Predicated region
        $region81: #{tpu_custom_call.1} parent=79 // pred_check
          %p578 = pneg %p226
        $region82: #{tpu_custom_call.1} parent=79 // pred_check_branch
          %580 = sbr.rel (%p578) target = $region84
        $region83: #{tpu_custom_call.1} parent=79 // pred_region
          %s581 = sand.u32 %s211, 1
          %s582 = scalar_lea.sflag [#allocation4], %s581
          %s583 = sand.u32 %s211, 1
          %s584 = smul.addr %s583, 8
          %s585 = scalar_lea.vmem [#allocation9], %s584
          %587 = dma.done %s582, 128
        $region84: #{tpu_custom_call.1} parent=79 // pred_fallthru
          _
      $region80: #{tpu_custom_call.1} parent=5 // pred_fallthru
        _
    $region6: #{tpu_custom_call.1} parent=1 // loop_footer
      %s23 = sadd.s32 1, %s19
    $region7: #{tpu_custom_call.1} parent=1 // loop_footer_branch
      %18 = sbr.rel target = $region3
    $region8: #{tpu_custom_call.1} parent=1 // loop_exit
      _
    %588 = vsyncpa [#allocation3], 1
    %s589 = scalar_lea.sflag [#allocation3], 1
    %590 = vsyncpa %s589, 1
    %591 = vsyncpa [#allocation6], 1
    %592 = vsyncpa [#allocation4], 1
    %s593 = scalar_lea.sflag [#allocation4], 1
    %594 = vsyncpa %s593, 1

</llo_original>
